<compile_context>
chip_gen: v7x
topology: tpu7x:2x2x1
jax: 0.10.0
libtpu: 0.0.40
codegen_flags: <defaults>
</compile_context>

<pallas_src>
import functools
import math

import jax
import jax.numpy as jnp
from jax.experimental import pallas as pl
from jax.experimental.pallas import tpu as pltpu


def _focal_loss_kernel(logits_ref, labels_ref, out_ref, acc_ref, *,
                       alpha, gamma, eps, n_rows, tile_n, steps_per_chunk,
                       mask_rows):
    chunk = pl.program_id(0)        # "parallel" axis (megacore split on v7x)
    step = pl.program_id(1)         # "arbitrary" accumulation axis

    @pl.when(step == 0)
    def _init():
        acc_ref[...] = jnp.zeros_like(acc_ref)

    x = logits_ref[...].astype(jnp.float32)            # (tile_n, C)
    labels = labels_ref[...]                           # (tile_n, 1) int32

    # Row-wise log-sum-exp pieces (the only full-width transcendental is exp).
    m = jnp.max(x, axis=-1, keepdims=True)             # (tile_n, 1)
    s = jnp.sum(jnp.exp(x - m), axis=-1, keepdims=True)

    # Gather the label-class logit: (1, C) class-index row broadcast against
    # (tile_n, 1) labels (no full (tile_n, C) iota materialized per step).
    cls = jax.lax.broadcasted_iota(jnp.int32, (1, x.shape[-1]), 1)
    x_lab = jnp.sum(jnp.where(cls == labels, x, 0.0), axis=-1, keepdims=True)

    # p_label = softmax(x)[label]; clamp in log-space -- identical to the
    # reference's clamp-then-log, but saves one EUP log per row.
    log_p = x_lab - m - jnp.log(s)                     # (tile_n, 1)
    log_p = jnp.clip(log_p, math.log(eps), math.log1p(-eps))
    p = jnp.exp(log_p)

    one_minus_p = 1.0 - p
    if gamma == 2.0:
        focal = one_minus_p * one_minus_p              # VPU square, no EUP pow
    elif float(gamma).is_integer() and gamma >= 0:
        focal = one_minus_p ** int(gamma)              # unrolled integer power
    else:
        focal = jnp.exp(gamma * jnp.log1p(-p))         # per-row scalars only

    loss_row = (-alpha) * log_p * focal                # (tile_n, 1), >= 0

    if mask_rows:
        # Only traced in when the grid has padded rows beyond n_rows.
        gtile = chunk * steps_per_chunk + step
        row_id = gtile * tile_n + jax.lax.broadcasted_iota(
            jnp.int32, loss_row.shape, 0)
        loss_row = jnp.where(row_id < n_rows, loss_row, 0.0)

    acc_ref[...] += loss_row

    @pl.when(step == pl.num_programs(1) - 1)
    def _finalize():
        out_ref[0, 0] = jnp.sum(acc_ref[...])          # partial sum per chunk


def focal_loss_pallas(logits, labels, alpha=0.25, gamma=2.0, eps=1e-7,
                      tile_n=None, num_chunks=2, target_block_bytes=2 << 20):
    """logits: (N, C) float; labels: (N,) int. Returns scalar focal loss
    (reduction='elementwise_mean', reverse_weighting=False)."""
    n, c = logits.shape
    labels2d = labels.reshape(n, 1).astype(jnp.int32)

    dtype_bytes = jnp.dtype(logits.dtype).itemsize
    mult = 16 if dtype_bytes == 2 else 8               # sublane packing
    row_bytes = c * dtype_bytes

    # Size the batch tile so one logits block is ~target_block_bytes (~2 MiB):
    # double-buffered input ~4 MiB, safe for v5e's 16 MiB scoped default and
    # v7x's 64 MiB physical VMEM.
    if tile_n is None:
        tile_n = max(mult, (int(target_block_bytes) // max(row_bytes, 1))
                     // mult * mult)
    tile_n = int(tile_n)
    if tile_n >= n:
        tile_n = n                                     # full-batch block is legal
    else:
        tile_n = max(mult, (tile_n // mult) * mult)
    # TODO(synk): for very large class counts (tens of thousands) add a C-chunk
    # grid axis with a streaming log-sum-exp so one (tile_n, C) block never
    # exceeds the per-generation VMEM budget.

    num_tiles = pl.cdiv(n, tile_n)
    chunks = max(1, min(int(num_chunks), num_tiles))   # parallel row chunks
    steps = pl.cdiv(num_tiles, chunks)                 # accumulation steps/chunk
    mask_rows = (chunks * steps * tile_n) != n

    def tile_idx(p, k):
        # Clamp so padded trailing tiles never issue an OOB DMA; their rows are
        # masked out of the sum inside the kernel.
        return jnp.minimum(p * steps + k, num_tiles - 1)

    kernel = functools.partial(
        _focal_loss_kernel,
        alpha=float(alpha), gamma=float(gamma), eps=float(eps),
        n_rows=n, tile_n=tile_n, steps_per_chunk=steps, mask_rows=mask_rows,
    )

    cost = pl.CostEstimate(
        flops=6 * n * c,
        transcendentals=n * c + 4 * n,
        bytes_accessed=n * c * dtype_bytes + n * 4 + chunks * 4,
    )

    partials = pl.pallas_call(
        kernel,
        out_shape=jax.ShapeDtypeStruct((chunks, 1), jnp.float32),
        grid_spec=pltpu.PrefetchScalarGridSpec(
            num_scalar_prefetch=0,
            grid=(chunks, steps),
            in_specs=[
                pl.BlockSpec((tile_n, c), lambda p, k: (tile_idx(p, k), 0)),
                pl.BlockSpec((tile_n, 1), lambda p, k: (tile_idx(p, k), 0)),
            ],
            out_specs=pl.BlockSpec((1, 1), lambda p, k: (p, 0),
                                   memory_space=pltpu.SMEM),
            scratch_shapes=[pltpu.VMEM((tile_n, 1), jnp.float32)],
        ),
        compiler_params=pltpu.CompilerParams(
            dimension_semantics=("parallel", "arbitrary")),
        cost_estimate=cost,
    )(logits, labels2d)

    return jnp.sum(partials) / jnp.float32(n)


def focal_loss_ref(logits, labels, alpha=0.25, gamma=2.0, eps=1e-7):
    """Pure-JAX reference mirroring the PyTorch focal_loss semantics."""
    n, c = logits.shape
    y_hot = jax.nn.one_hot(labels, c, dtype=jnp.float32)
    p = jax.nn.softmax(logits.astype(jnp.float32), axis=-1)
    p = jnp.clip(p, eps, 1.0 - eps)
    loss = -y_hot * jnp.log(p)
    loss = alpha * loss * (1.0 - p) ** gamma
    return jnp.sum(loss) / n


# TODO(synk): reverse_weighting=True branch (per-row data-dependent scatter) is
# not implemented; the module's forward uses the default reverse_weighting=False.

if __name__ == "__main__":
    # FocalLoss.__init__ has no learnable parameters; alpha/gamma/eps are scalars.
    N, C = 20, 32            # N non-multiple of the small tile to exercise masking
    key = jax.random.PRNGKey(0)
    k_logits, k_labels = jax.random.split(key)
    logits = jax.random.normal(k_logits, (N, C), dtype=jnp.float32)
    labels = jax.random.randint(k_labels, (N,), 0, C, dtype=jnp.int32)

    ref = jax.block_until_ready(focal_loss_ref(logits, labels))

    # 1) Default auto-tiling: one full-batch tile, single chunk.
    out = jax.block_until_ready(focal_loss_pallas(logits, labels))
    assert jnp.allclose(out, ref, rtol=1e-5, atol=1e-6), (out, ref)

    # 2) Forced tiny tiles: 2 parallel chunks x 2 steps with padded trailing
    #    tiles (exercises the masked + multi-chunk partial-sum path).
    out2 = jax.block_until_ready(
        focal_loss_pallas(logits, labels, tile_n=8, num_chunks=2))
    assert jnp.allclose(out2, ref, rtol=1e-5, atol=1e-6), (out2, ref)

    print("KERNEL_OK")
</pallas_src>

<mosaic_0001>
module attributes {stable_mosaic.version = 11 : i64} {
  func.func @_focal_loss_kernel(%arg0: i32, %arg1: i32, %arg2: memref<20x32xf32, #tpu.memory_space<vmem>>, %arg3: memref<20x1xi32, #tpu.memory_space<vmem>>, %arg4: memref<1x1xf32, #tpu.memory_space<smem>>, %arg5: memref<20x1xf32, #tpu.memory_space<vmem>>) attributes {dimension_semantics = [#tpu.dimension_semantics<parallel>, #tpu.dimension_semantics<arbitrary>], iteration_bounds = array<i64: 1, 1>, scalar_prefetch = 0 : i64, scratch_operands = 1 : i64, tpu.core_type = #tpu.core_type<tc>, window_params = [{transform_indices = @transform_0, window_bounds = array<i64: 20, 32>}, {transform_indices = @transform_1, window_bounds = array<i64: 20, 1>}, {transform_indices = @transform_2, window_bounds = array<i64: 1, 1>}]} {
    %c0_i32 = arith.constant 0 : i32
    %0 = arith.cmpi eq, %arg1, %c0_i32 : i32
    %1 = arith.extui %0 : i1 to i32
    %c0_i32_0 = arith.constant 0 : i32
    %2 = arith.cmpi ne, %1, %c0_i32_0 : i32
    scf.if %2 {
      %cst_17 = arith.constant 0.000000e+00 : f32
      %40 = vector.broadcast %cst_17 : f32 to vector<20x1xf32>
      %c0_18 = arith.constant 0 : index
      %c0_19 = arith.constant 0 : index
      %41 = vector.load %arg5[%c0_18, %c0_19] : memref<20x1xf32, #tpu.memory_space<vmem>>, vector<20x1xf32>
      tpu.vector_store %arg5[%c0_18, %c0_19], %40 {strides = array<i32>} : memref<20x1xf32, #tpu.memory_space<vmem>>, vector<20x1xf32>,
    } else {
    }
    %c0 = arith.constant 0 : index
    %c0_1 = arith.constant 0 : index
    %3 = vector.load %arg2[%c0, %c0_1] : memref<20x32xf32, #tpu.memory_space<vmem>>, vector<20x32xf32>
    %c0_2 = arith.constant 0 : index
    %c0_3 = arith.constant 0 : index
    %4 = vector.load %arg3[%c0_2, %c0_3] : memref<20x1xi32, #tpu.memory_space<vmem>>, vector<20x1xi32>
    %cst = arith.constant dense<0xFF800000> : vector<20xf32>
    %5 = vector.multi_reduction <maximumf>, %3, %cst [1] : vector<20x32xf32> to vector<20xf32>
    %6 = vector.shape_cast %5 : vector<20xf32> to vector<20x1xf32>
    %7 = vector.broadcast %6 : vector<20x1xf32> to vector<20x32xf32>
    %8 = arith.subf %3, %7 : vector<20x32xf32>
    %9 = math.exp %8 : vector<20x32xf32>
    %cst_4 = arith.constant dense<0.000000e+00> : vector<20xf32>
    %10 = vector.multi_reduction <add>, %9, %cst_4 [1] : vector<20x32xf32> to vector<20xf32>
    %11 = vector.shape_cast %10 : vector<20xf32> to vector<20x1xf32>
    %12 = tpu.iota {dimensions = array<i32: 1>} : vector<1x32xi32>
    %13 = vector.broadcast %12 : vector<1x32xi32> to vector<20x32xi32>
    %14 = vector.broadcast %4 : vector<20x1xi32> to vector<20x32xi32>
    %15 = arith.cmpi eq, %13, %14 : vector<20x32xi32>
    %cst_5 = arith.constant 0.000000e+00 : f32
    %16 = vector.broadcast %cst_5 : f32 to vector<20x32xf32>
    %17 = arith.select %15, %3, %16 : vector<20x32xi1>, vector<20x32xf32>
    %cst_6 = arith.constant dense<0.000000e+00> : vector<20xf32>
    %18 = vector.multi_reduction <add>, %17, %cst_6 [1] : vector<20x32xf32> to vector<20xf32>
    %19 = vector.shape_cast %18 : vector<20xf32> to vector<20x1xf32>
    %20 = arith.subf %19, %6 : vector<20x1xf32>
    %21 = math.log %11 : vector<20x1xf32>
    %22 = arith.subf %20, %21 : vector<20x1xf32>
    %cst_7 = arith.constant -16.1180954 : f32
    %cst_8 = arith.constant -1.00000008E-7 : f32
    %23 = vector.broadcast %cst_7 : f32 to vector<20x1xf32>
    %24 = arith.maximumf %23, %22 : vector<20x1xf32>
    %25 = vector.broadcast %cst_8 : f32 to vector<20x1xf32>
    %26 = arith.minimumf %25, %24 : vector<20x1xf32>
    %27 = math.exp %26 : vector<20x1xf32>
    %cst_9 = arith.constant 1.000000e+00 : f32
    %28 = vector.broadcast %cst_9 : f32 to vector<20x1xf32>
    %29 = arith.subf %28, %27 : vector<20x1xf32>
    %30 = arith.mulf %29, %29 : vector<20x1xf32>
    %cst_10 = arith.constant -2.500000e-01 : f32
    %31 = vector.broadcast %cst_10 : f32 to vector<20x1xf32>
    %32 = arith.mulf %31, %26 : vector<20x1xf32>
    %33 = arith.mulf %32, %30 : vector<20x1xf32>
    %c0_11 = arith.constant 0 : index
    %c0_12 = arith.constant 0 : index
    %34 = vector.load %arg5[%c0_11, %c0_12] : memref<20x1xf32, #tpu.memory_space<vmem>>, vector<20x1xf32>
    %35 = arith.addf %34, %33 : vector<20x1xf32>
    %c0_13 = arith.constant 0 : index
    %c0_14 = arith.constant 0 : index
    %36 = vector.load %arg5[%c0_13, %c0_14] : memref<20x1xf32, #tpu.memory_space<vmem>>, vector<20x1xf32>
    tpu.vector_store %arg5[%c0_13, %c0_14], %35 {strides = array<i32>} : memref<20x1xf32, #tpu.memory_space<vmem>>, vector<20x1xf32>,
    %c0_i32_15 = arith.constant 0 : i32
    %37 = arith.cmpi eq, %arg1, %c0_i32_15 : i32
    %38 = arith.extui %37 : i1 to i32
    %c0_i32_16 = arith.constant 0 : i32
    %39 = arith.cmpi ne, %38, %c0_i32_16 : i32
    scf.if %39 {
      %c0_17 = arith.constant 0 : index
      %c0_18 = arith.constant 0 : index
      %40 = vector.load %arg5[%c0_17, %c0_18] : memref<20x1xf32, #tpu.memory_space<vmem>>, vector<20x1xf32>
      %41 = vector.shape_cast %40 : vector<20x1xf32> to vector<1x20x1xf32>
      %cst_19 = arith.constant dense<0.000000e+00> : vector<1xf32>
      %42 = vector.multi_reduction <add>, %41, %cst_19 [1, 2] : vector<1x20x1xf32> to vector<1xf32>
      %43 = vector.shape_cast %42 : vector<1xf32> to vector<1x1x1xf32>
      %44 = vector.extract %43[0, 0, 0] : f32 from vector<1x1x1xf32>
      %c0_20 = arith.constant 0 : index
      %c0_21 = arith.constant 0 : index
      %45 = memref.load %arg4[%c0_20, %c0_21] : memref<1x1xf32, #tpu.memory_space<smem>>
      memref.store %44, %arg4[%c0_20, %c0_21] : memref<1x1xf32, #tpu.memory_space<smem>>
    } else {
    }
    return
  }
  func.func @transform_0(%arg0: i32, %arg1: i32) -> (i32, i32) {
    %c1_i32 = arith.constant 1 : i32
    %0 = arith.muli %arg0, %c1_i32 : i32
    %1 = arith.addi %0, %arg1 : i32
    %c0_i32 = arith.constant 0 : i32
    %2 = arith.minsi %1, %c0_i32 : i32
    %c0_i32_0 = arith.constant 0 : i32
    %c0_i32_1 = arith.constant 0 : i32
    return %2, %c0_i32_0 : i32, i32
  }
  func.func @transform_1(%arg0: i32, %arg1: i32) -> (i32, i32) {
    %c1_i32 = arith.constant 1 : i32
    %0 = arith.muli %arg0, %c1_i32 : i32
    %1 = arith.addi %0, %arg1 : i32
    %c0_i32 = arith.constant 0 : i32
    %2 = arith.minsi %1, %c0_i32 : i32
    %c0_i32_0 = arith.constant 0 : i32
    %c0_i32_1 = arith.constant 0 : i32
    return %2, %c0_i32_0 : i32, i32
  }
  func.func @transform_2(%arg0: i32, %arg1: i32) -> (i32, i32) {
    %c0_i32 = arith.constant 0 : i32
    %c0_i32_0 = arith.constant 0 : i32
    return %arg0, %c0_i32 : i32, i32
  }
}

</mosaic_0001>

<llo_original>
// kernel: tpu_custom_call.1
$region0: #{tpu_custom_call.1}
  #allocation0 [shape = 'u32[]', space=smem, size = 0x4, offset = 0x4, fixed_abs, tag = 'smem constant byte address 0x4 - core index']
  #allocation1 [shape = 'u32[144,128]{1,0:T(1,128)}', space=vmem, size = 0x12000, scoped, tag = 'internal scratch']
  #allocation2 [shape = 'f32[20,1]{1,0:T(8,128)}', space=vmem, size = 0x3000, scoped, tag = 'scratch operand']
  %s0 = inlined_call_operand.vmem [shape: f32[20,32], index: 0, kind: input, shape index: {}]
  %s1 = inlined_call_operand.vmem [shape: s32[20,1], index: 1, kind: input, shape index: {}]
  %s2 = inlined_call_operand.hbm [shape: f32[1,1], index: 2, kind: output, shape index: {}]
  %s3 = sld [smem:[#allocation0]]
  $region26: #{tpu_custom_call.1} parent=0
    _
  %s5 = ssub.s32 1, %s3
  %s6 = scalar_select 0, %s5, %s3
  $region1: #{tpu_custom_call.1} parent=0
    #allocation3 [shape = 'u8[512]{0}', space=smem, size = 0x200, scoped, tag = 'output window, operand 0, single buffered']
    #allocation4 [shape = 's32[1]{0}', space=sflag, size = 0x4, scoped, tag = 'scoped memory for tpu_custom_call.1']
    %7 = vsyncpa [#allocation4], 0
    // Predicated region
    $region2: #{tpu_custom_call.1} parent=1 // pred_check
      _
    $region3: #{tpu_custom_call.1} parent=1 // pred_check_branch
      %9 = sbr.rel (0) target = $region5
    $region4: #{tpu_custom_call.1} parent=1 // pred_region
      %s10 = sadd.s32 0, 0
      %p11 = scmp.lt.s32.totalorder %s10, 0
      %s12 = scalar_select %p11, %s10, 0
      %s13 = smul.u32 3, %s12
      %p14 = scmp.lt.s32.totalorder %s13, 2
      %s15 = scalar_select %p14, %s13, 2
      %s16 = smul.addr %s15, 8
      %s17 = scalar_lea.vmem %s0, %s16
      %s18 = sadd.s32 0, 0
      %p19 = scmp.lt.s32.totalorder %s18, 0
      %s20 = scalar_select %p19, %s18, 0
      %s21 = smul.u32 3, %s20
    $region5: #{tpu_custom_call.1} parent=1 // pred_fallthru
      _
    // Predicated region
    $region6: #{tpu_custom_call.1} parent=1 // pred_check
      _
    $region7: #{tpu_custom_call.1} parent=1 // pred_check_branch
      %23 = sbr.rel (0) target = $region9
    $region8: #{tpu_custom_call.1} parent=1 // pred_region
      %s24 = sadd.s32 0, 0
      %p25 = scmp.lt.s32.totalorder %s24, 0
      %s26 = scalar_select %p25, %s24, 0
      %s27 = smul.u32 3, %s26
      %p28 = scmp.lt.s32.totalorder %s27, 2
      %s29 = scalar_select %p28, %s27, 2
      %s30 = smul.addr %s29, 8
      %s31 = scalar_lea.vmem %s1, %s30
      %s32 = sadd.s32 0, 0
      %p33 = scmp.lt.s32.totalorder %s32, 0
      %s34 = scalar_select %p33, %s32, 0
      %s35 = smul.u32 3, %s34
    $region9: #{tpu_custom_call.1} parent=1 // pred_fallthru
      _
    %s36 = sadd.s32 0, 0
    %p37 = scmp.lt.s32.totalorder %s36, 0
    %s38 = scalar_select %p37, %s36, 0
    %s39 = smul.u32 3, %s38
    %p40 = scmp.lt.s32.totalorder %s39, 2
    %s41 = scalar_select %p40, %s39, 2
    %s42 = smul.addr %s41, 8
    %s43 = scalar_lea.vmem %s0, %s42
    %s44 = sadd.s32 0, 0
    %p45 = scmp.lt.s32.totalorder %s44, 0
    %s46 = scalar_select %p45, %s44, 0
    %s47 = smul.u32 3, %s46
    %p48 = scmp.lt.s32.totalorder %s47, 2
    %s49 = scalar_select %p48, %s47, 2
    %s50 = smul.addr %s49, 8
    %s51 = scalar_lea.vmem %s1, %s50
    %s52 = sadd.s32 0, 0
    %p53 = scmp.lt.s32.totalorder %s52, 0
    %s54 = scalar_select %p53, %s52, 0
    %s55 = smul.u32 3, %s54
    %p56 = scmp.lt.s32.totalorder %s55, 2
    %s57 = scalar_select %p56, %s55, 2
    %s58 = smul.addr %s57, 8
    %s59 = scalar_lea.vmem %s0, %s58
    %s60 = sadd.s32 0, 0
    %p61 = scmp.lt.s32.totalorder %s60, 0
    %s62 = scalar_select %p61, %s60, 0
    %s63 = smul.u32 3, %s62
    %s64 = sadd.s32 0, 0
    %p65 = scmp.lt.s32.totalorder %s64, 0
    %s66 = scalar_select %p65, %s64, 0
    %s67 = smul.u32 3, %s66
    %p68 = scmp.lt.s32.totalorder %s67, 2
    %s69 = scalar_select %p68, %s67, 2
    %s70 = smul.addr %s69, 8
    %s71 = scalar_lea.vmem %s1, %s70
    %s72 = sadd.s32 0, 0
    %p73 = scmp.lt.s32.totalorder %s72, 0
    %s74 = scalar_select %p73, %s72, 0
    %s75 = smul.u32 3, %s74
    %p76 = scmp.eq.s32.totalorder 0, 0
    // Predicated region
    $region10: #{tpu_custom_call.1} parent=1 // pred_check
      %p77 = pneg %p76
    $region11: #{tpu_custom_call.1} parent=1 // pred_check_branch
      %79 = sbr.rel (%p77) target = $region13
    $region12: #{tpu_custom_call.1} parent=1 // pred_region
      %vm80 = vcmask 7168
      %81 = vst.msk [vmem:[#allocation2] sm:$0xff] %vm80, 0.0
      %82 = vst.msk [vmem:[#allocation2 + $0x8] sm:$0xff] %vm80, 0.0
      %vm83 = vcmask 3072
      %84 = vst.msk [vmem:[#allocation2 + $0x10] sm:$0xf] %vm83, 0.0
    $region13: #{tpu_custom_call.1} parent=1 // pred_fallthru
      _
    %v85 = vld [vmem:[%s59] sm:$0xff]
    %v86 = vld [vmem:[%s59 + $0x8] sm:$0xff]
    %v87 = vld [vmem:[%s59 + $0x10] sm:$0xf]
    %v88 = vld [vmem:[%s71] sm:$0xff]
    %v89 = vld [vmem:[%s71 + $0x8] sm:$0xff]
    %v90 = vld [vmem:[%s71 + $0x10] sm:$0xf]
    %vm91 = vcmask 261120
    %v92 = vsel %vm91, %v85, -inf
    %93 = vmax.xlane.f32.xlu0 %v92
    %v94 = vpop.xlane.xlu0 %93
    %v95 = vsel %vm91, %v86, -inf
    %96 = vmax.xlane.f32.xlu0 %v95
    %v97 = vpop.xlane.xlu0 %96
    %vm98 = vcmask 257024
    %v99 = vsel %vm98, %v87, -inf
    %100 = vmax.xlane.f32.xlu0 %v99
    %v101 = vpop.xlane.xlu0 %100
    %v102 = vsub.f32 %v85, %v94
    %v103 = vsub.f32 %v86, %v97
    %v104 = vsub.f32 %v87, %v101
    %v105 = vmul.f32 %v102, 1.442695
    %v106 = vpow.pop %v105
    %v107 = vmul.f32 %v103, 1.442695
    %v108 = vpow.pop %v107
    %v109 = vmul.f32 %v104, 1.442695
    %v110 = vpow.pop %v109
    %v111 = vsel %vm91, %v106, 0.0
    %112 = vadd.xlane.f32.xlu0 %v111
    %v113 = vpop.xlane.xlu0 %112
    %v114 = vsel %vm91, %v108, 0.0
    %115 = vadd.xlane.f32.xlu0 %v114
    %v116 = vpop.xlane.xlu0 %115
    %v117 = vsel %vm98, %v110, 0.0
    %118 = vadd.xlane.f32.xlu0 %v117
    %v119 = vpop.xlane.xlu0 %118
    %v120 = vlaneseq
    %v121 = vand.u32 %v120, 127
    %122 = vset.pattern.permute.xlu0 0
    %123 = vperm.xlu0 %122, %v88
    %v124 = vpop.permute.xlu0 %123
    %125 = vset.pattern.permute.xlu0 0
    %126 = vperm.xlu0 %125, %v89
    %v127 = vpop.permute.xlu0 %126
    %128 = vset.pattern.permute.xlu0 0
    %129 = vperm.xlu0 %128, %v90
    %v130 = vpop.permute.xlu0 %129
    %vm131 = vcmp.eq.s32.totalorder %v121, %v124
    %vm132 = vcmp.eq.s32.totalorder %v121, %v127
    %vm133 = vcmp.eq.s32.totalorder %v121, %v130
    %v134 = vsel %vm131, %v85, 0.0
    %v135 = vsel %vm132, %v86, 0.0
    %v136 = vsel %vm133, %v87, 0.0
    %v137 = vsel %vm91, %v134, 0.0
    %138 = vadd.xlane.f32.xlu0 %v137
    %v139 = vpop.xlane.xlu0 %138
    %v140 = vsel %vm91, %v135, 0.0
    %141 = vadd.xlane.f32.xlu0 %v140
    %v142 = vpop.xlane.xlu0 %141
    %v143 = vsel %vm98, %v136, 0.0
    %144 = vadd.xlane.f32.xlu0 %v143
    %v145 = vpop.xlane.xlu0 %144
    %v146 = vsub.f32 %v139, %v94
    %v147 = vsub.f32 %v142, %v97
    %v148 = vsub.f32 %v145, %v101
    %v149 = vlog2.pop %v113
    %v150 = vmul.f32 %v149, 0.6931472
    %v151 = vlog2.pop %v116
    %v152 = vmul.f32 %v151, 0.6931472
    %v153 = vlog2.pop %v119
    %v154 = vmul.f32 %v153, 0.6931472
    %v155 = vsub.f32 %v146, %v150
    %v156 = vsub.f32 %v147, %v152
    %v157 = vsub.f32 %v148, %v154
    %v158 = vmax.f32 %v155, -16.118095
    %v159 = vmax.f32 %v156, -16.118095
    %v160 = vmax.f32 %v157, -16.118095
    %v161 = vmin.f32 %v158, -1.0000001e-07
    %v162 = vmin.f32 %v159, -1.0000001e-07
    %v163 = vmin.f32 %v160, -1.0000001e-07
    %v164 = vmul.f32 %v161, 1.442695
    %v165 = vpow.pop %v164
    %v166 = vmul.f32 %v162, 1.442695
    %v167 = vpow.pop %v166
    %v168 = vmul.f32 %v163, 1.442695
    %v169 = vpow.pop %v168
    %v170 = vsub.f32 1.0, %v165
    %v171 = vsub.f32 1.0, %v167
    %v172 = vsub.f32 1.0, %v169
    %v173 = vmul.f32 %v170, %v170
    %v174 = vmul.f32 %v171, %v171
    %v175 = vmul.f32 %v172, %v172
    %v176 = vmul.f32 %v161, -0.25
    %v177 = vmul.f32 %v162, -0.25
    %v178 = vmul.f32 %v163, -0.25
    %v179 = vmul.f32 %v176, %v173
    %v180 = vmul.f32 %v177, %v174
    %v181 = vmul.f32 %v178, %v175
    %v182 = vld [vmem:[#allocation2] sm:$0xff]
    %v183 = vld [vmem:[#allocation2 + $0x8] sm:$0xff]
    %v184 = vld [vmem:[#allocation2 + $0x10] sm:$0xf]
    %v185 = vadd.f32 %v182, %v179
    %v186 = vadd.f32 %v183, %v180
    %v187 = vadd.f32 %v184, %v181
    %vm188 = vcmask 7168
    %189 = vst.msk [vmem:[#allocation2] sm:$0xff] %vm188, %v185
    %190 = vst.msk [vmem:[#allocation2 + $0x8] sm:$0xff] %vm188, %v186
    %vm191 = vcmask 3072
    %192 = vst.msk [vmem:[#allocation2 + $0x10] sm:$0xf] %vm191, %v187
    // Predicated region
    $region14: #{tpu_custom_call.1} parent=1 // pred_check
      %p193 = pneg %p76
    $region15: #{tpu_custom_call.1} parent=1 // pred_check_branch
      %195 = sbr.rel (%p193) target = $region17
    $region16: #{tpu_custom_call.1} parent=1 // pred_region
      %v196 = vld [vmem:[#allocation2] sm:$0xff]
      %v197 = vld [vmem:[#allocation2 + $0x8] sm:$0xff]
      %v198 = vld [vmem:[#allocation2 + $0x10] sm:$0xf]
      %v199 = vsel %vm188, %v196, 0.0
      %v200 = vsel %vm188, %v197, 0.0
      %v201 = vadd.f32 %v199, %v200
      %v202 = vsel %vm191, %v198, 0.0
      %v203 = vadd.f32 %v201, %v202
      %204 = vadd.xlane.f32.xlu0 %v203
      %v205 = vpop.xlane.xlu0 %204
      %v206 = vrot.slane %v205, 4
      %v207 = vadd.f32 %v205, %v206
      %v208 = vrot.slane %v207, 2
      %v209 = vadd.f32 %v207, %v208
      %v210 = vrot.slane %v209, 1
      %v211 = vadd.f32 %v209, %v210
      %s212 = vtos %v211
      %s213 = scalar_lea.smem [#allocation3], 0
      %214 = sst [smem:[%s213]] %s212
    $region17: #{tpu_custom_call.1} parent=1 // pred_fallthru
      _
    // Predicated region
    $region18: #{tpu_custom_call.1} parent=1 // pred_check
      _
    $region19: #{tpu_custom_call.1} parent=1 // pred_check_branch
      %216 = sbr.rel (0) target = $region21
    $region20: #{tpu_custom_call.1} parent=1 // pred_region
      %s218 = ssub.s32 16, 16
      %219 = vsyncadd [#allocation4], %s218
      %222 = dma.smem_to_hbm [#allocation3], 16, %s2, [#allocation4]
    $region21: #{tpu_custom_call.1} parent=1 // pred_fallthru
      _
    // Predicated region
    $region22: #{tpu_custom_call.1} parent=1 // pred_check
      _
    $region23: #{tpu_custom_call.1} parent=1 // pred_check_branch
      %224 = sbr.rel (0) target = $region25
    $region24: #{tpu_custom_call.1} parent=1 // pred_region
      %225 = dma.done [#allocation4], 16
    $region25: #{tpu_custom_call.1} parent=1 // pred_fallthru
      _
    %226 = sfence
    %227 = vsyncpa [#allocation4], 1

</llo_original>
